<compile_context>
chip_gen: v5e
topology: v5e:2x2
jax: 0.10.0
libtpu: 0.0.40
codegen_flags: <defaults>
</compile_context>

<pallas_src>
import functools
import math

import jax
import jax.numpy as jnp
from jax import lax
from jax.experimental import pallas as pl
from jax.experimental.pallas import tpu as pltpu

_LANES = 128
_TARGET_BLOCK_BYTES = 2 << 20        # ~2 MiB per buffer per array
_MIN_GRID_STEPS = 4                  # aim for >=4 programs (megacore sharding)
_VMEM_LIMIT_BYTES = 28 << 20         # explicit scoped-VMEM limit (safe all gens)
_SMALL_RAGGED_VMEM_BYTES = 2 << 20   # max padded footprint for no-pad ragged path


def _round_up(x, m):
    return ((x + m - 1) // m) * m


def _cdiv(a, b):
    return (a + b - 1) // b


def _cdf_kernel(x_ref, cdf_ref, pdf_ref, *, m, scale, coef):
    # All math in f32; erf + exp go to the EUP, the rest is VPU elementwise.
    # astype is a no-op for f32 inputs.
    x = x_ref[...].astype(jnp.float32)
    u = (x - m) * scale                       # u = (x - m) / (s * sqrt(2))
    cdf_ref[...] = (0.5 * (lax.erf(u) + 1.0)).astype(cdf_ref.dtype)
    pdf_ref[...] = (coef * jnp.exp(-(u * u))).astype(pdf_ref.dtype)  # 2*pdf


def _pick_block_rows(rows, itemsize):
    """Byte-targeted block rows, guaranteeing >= _MIN_GRID_STEPS programs."""
    if rows <= 8:
        return rows  # full extent; cannot split below one sublane tile
    by_bytes = max(8, (_TARGET_BLOCK_BYTES // (_LANES * itemsize)) // 8 * 8)
    by_split = max(8, _round_up(_cdiv(rows, _MIN_GRID_STEPS), 8))
    return min(by_bytes, by_split)


def cdf_forward(x, m, s):
    """Pallas equivalent of cdf(m, s, quant_src).forward(x).

    Returns (weight_cdf, weight_pdf) with the same shape/dtype as x.
    """
    orig_shape = x.shape
    orig_dtype = x.dtype
    n = x.size
    itemsize = x.dtype.itemsize

    # Fold the Normal's parameters at trace time (no per-element divide).
    # TODO(synk): if m/s ever become traced (learned) arrays, pass them as
    # SMEM scalars instead of baking them as Python constants here.
    inv_s = 1.0 / float(s)
    kernel = functools.partial(
        _cdf_kernel,
        m=float(m),
        scale=inv_s * 0.7071067811865476,            # 1/(s*sqrt(2))
        coef=2.0 * inv_s / math.sqrt(2.0 * math.pi),  # 2/(s*sqrt(2*pi))
    )

    cost = pl.CostEstimate(
        flops=8 * n, transcendentals=2 * n, bytes_accessed=3 * n * itemsize)

    # ---------- Fast path: element count is lane-aligned (n % 128 == 0). ----
    if n % _LANES == 0 and n > 0:
        rows = n // _LANES
        x2d = x.reshape(rows, _LANES)                # free for contiguous x
        block_rows = _pick_block_rows(rows, itemsize)
        grid = (pl.cdiv(rows, block_rows),)          # ragged last block masked
        spec = pl.BlockSpec((block_rows, _LANES), lambda i: (i, 0))
        out_sds = jax.ShapeDtypeStruct((rows, _LANES), orig_dtype)
        cdf2d, pdf2d = pl.pallas_call(
            kernel,
            out_shape=(out_sds, out_sds),
            grid_spec=pltpu.PrefetchScalarGridSpec(
                num_scalar_prefetch=0,
                grid=grid,
                in_specs=[spec],
                out_specs=(spec, spec)),
            compiler_params=pltpu.CompilerParams(
                dimension_semantics=("parallel",),
                vmem_limit_bytes=_VMEM_LIMIT_BYTES),
            cost_estimate=cost,
        )(x2d)
        return cdf2d.reshape(orig_shape), pdf2d.reshape(orig_shape)

    # ---------- Ragged path A: small/medium arrays, no pad / no slice. ------
    # Process the natural (prod(leading), last) 2-D view with one full-extent
    # block.  Reshape in/out is free; the lane padding only exists in VMEM.
    if len(orig_shape) == 0:
        r, c = 1, 1
    else:
        r = max(1, math.prod(orig_shape[:-1]))
        c = max(1, orig_shape[-1])
    padded_buf_bytes = _round_up(r, 8) * _round_up(c, _LANES) * itemsize
    if padded_buf_bytes <= _SMALL_RAGGED_VMEM_BYTES:
        x2d = x.reshape(r, c)
        spec = pl.BlockSpec((r, c), lambda i: (0, 0))
        out_sds = jax.ShapeDtypeStruct((r, c), orig_dtype)
        cdf2d, pdf2d = pl.pallas_call(
            kernel,
            out_shape=(out_sds, out_sds),
            grid_spec=pltpu.PrefetchScalarGridSpec(
                num_scalar_prefetch=0,
                grid=(1,),
                in_specs=[spec],
                out_specs=(spec, spec)),
            compiler_params=pltpu.CompilerParams(
                dimension_semantics=("arbitrary",),
                vmem_limit_bytes=_VMEM_LIMIT_BYTES),
            cost_estimate=cost,
        )(x2d)
        return cdf2d.reshape(orig_shape), pdf2d.reshape(orig_shape)

    # ---------- Ragged path B: large arrays -> pad/slice fallback. ----------
    # TODO(synk): replace this extra HBM pass with an in-kernel masked tail
    # store driven by an SMEM-resident element count for very large ragged
    # inputs (rare for this module).
    x_flat = jnp.ravel(x)
    pad = (-n) % _LANES
    x_flat = jnp.pad(x_flat, (0, pad))
    rows = (n + pad) // _LANES
    x2d = x_flat.reshape(rows, _LANES)
    block_rows = _pick_block_rows(rows, itemsize)
    grid = (pl.cdiv(rows, block_rows),)
    spec = pl.BlockSpec((block_rows, _LANES), lambda i: (i, 0))
    out_sds = jax.ShapeDtypeStruct((rows, _LANES), orig_dtype)
    cdf2d, pdf2d = pl.pallas_call(
        kernel,
        out_shape=(out_sds, out_sds),
        grid_spec=pltpu.PrefetchScalarGridSpec(
            num_scalar_prefetch=0,
            grid=grid,
            in_specs=[spec],
            out_specs=(spec, spec)),
        compiler_params=pltpu.CompilerParams(
            dimension_semantics=("parallel",),
            vmem_limit_bytes=_VMEM_LIMIT_BYTES),
        cost_estimate=cost,
    )(x2d)
    weight_cdf = cdf2d.reshape(-1)[:n].reshape(orig_shape)
    weight_pdf = pdf2d.reshape(-1)[:n].reshape(orig_shape)
    return weight_cdf, weight_pdf


def _reference(x, m, s):
    z = (x.astype(jnp.float32) - m) / s
    cdf = 0.5 * (1.0 + lax.erf(z / jnp.sqrt(2.0)))
    pdf2 = 2.0 / (s * jnp.sqrt(2.0 * jnp.pi)) * jnp.exp(-0.5 * z * z)
    return cdf.astype(x.dtype), pdf2.astype(x.dtype)


def _check(x, m, s, atol=1e-5, rtol=1e-5):
    w_cdf, w_pdf = cdf_forward(x, m, s)
    jax.block_until_ready((w_cdf, w_pdf))
    ref_cdf, ref_pdf = _reference(x, m, s)
    assert w_cdf.shape == x.shape and w_pdf.shape == x.shape
    assert w_cdf.dtype == x.dtype and w_pdf.dtype == x.dtype
    assert jnp.allclose(w_cdf, ref_cdf, atol=atol, rtol=rtol)
    assert jnp.allclose(w_pdf, ref_pdf, atol=atol, rtol=rtol)


if __name__ == "__main__":
    key = jax.random.PRNGKey(0)
    # Deterministic "parameters" of the module (mean / std of the Normal).
    m = 0.25
    s = 1.5
    # quant_src is unused in forward(); nothing to initialize for it.

    k0, k1, k2, k3 = jax.random.split(key, 4)

    # Primary case: small NCHW activations (n multiple of 128 -> aligned fast
    # path with a >=2-program parallel grid).
    x = jax.random.normal(k0, (2, 4, 16, 16), dtype=jnp.float32) * 2.0 + 0.3
    _check(x, m, s)

    # Ragged-size, small: element count not a multiple of 128 -> no-pad
    # full-extent 2-D-view path.
    x_odd = jax.random.normal(k1, (3, 5, 7, 11), dtype=jnp.float32)
    _check(x_odd, m, s)

    # Aligned multi-block case with a ragged last grid block (boundary
    # masking of the cdiv grid).
    x_big = jax.random.normal(k2, (1, 1, 2050, 128), dtype=jnp.float32)
    _check(x_big, m, s)

    # Ragged-size, larger lane-sparse shape: exercises the pad/slice fallback.
    x_rag = jax.random.normal(k3, (4097, 3), dtype=jnp.float32)
    _check(x_rag, m, s)

    # bf16 I/O case (dtype-aware block sizing; math still f32 in-kernel).
    x_bf16 = (jax.random.normal(k0, (2, 4, 16, 16), dtype=jnp.float32)
              ).astype(jnp.bfloat16)
    _check(x_bf16, m, s, atol=2e-2, rtol=2e-2)

    print("KERNEL_OK")
</pallas_src>

<mosaic_0001>
module attributes {stable_mosaic.version = 11 : i64} {
  func.func @_cdf_kernel(%arg0: i32, %arg1: memref<8x128xf32, #tpu.memory_space<vmem>>, %arg2: memref<8x128xf32, #tpu.memory_space<vmem>>, %arg3: memref<8x128xf32, #tpu.memory_space<vmem>>) attributes {dimension_semantics = [#tpu.dimension_semantics<parallel>], iteration_bounds = array<i64: 2>, scalar_prefetch = 0 : i64, scratch_operands = 0 : i64, tpu.core_type = #tpu.core_type<tc>, window_params = [{transform_indices = @transform_0, window_bounds = array<i64: 8, 128>}, {transform_indices = @transform_1, window_bounds = array<i64: 8, 128>}, {transform_indices = @transform_2, window_bounds = array<i64: 8, 128>}]} {
    %c0 = arith.constant 0 : index
    %c0_0 = arith.constant 0 : index
    %0 = vector.load %arg1[%c0, %c0_0] : memref<8x128xf32, #tpu.memory_space<vmem>>, vector<8x128xf32>
    %cst = arith.constant 2.500000e-01 : f32
    %1 = vector.broadcast %cst : f32 to vector<8x128xf32>
    %2 = arith.subf %0, %1 : vector<8x128xf32>
    %cst_1 = arith.constant 0.471404523 : f32
    %3 = vector.broadcast %cst_1 : f32 to vector<8x128xf32>
    %4 = arith.mulf %2, %3 : vector<8x128xf32>
    %5 = math.erf %4 : vector<8x128xf32>
    %cst_2 = arith.constant 1.000000e+00 : f32
    %6 = vector.broadcast %cst_2 : f32 to vector<8x128xf32>
    %7 = arith.addf %5, %6 : vector<8x128xf32>
    %cst_3 = arith.constant 5.000000e-01 : f32
    %8 = vector.broadcast %cst_3 : f32 to vector<8x128xf32>
    %9 = arith.mulf %8, %7 : vector<8x128xf32>
    %c0_4 = arith.constant 0 : index
    %c0_5 = arith.constant 0 : index
    %10 = vector.load %arg2[%c0_4, %c0_5] : memref<8x128xf32, #tpu.memory_space<vmem>>, vector<8x128xf32>
    tpu.vector_store %arg2[%c0_4, %c0_5], %9 {strides = array<i32>} : memref<8x128xf32, #tpu.memory_space<vmem>>, vector<8x128xf32>,
    %11 = arith.mulf %4, %4 : vector<8x128xf32>
    %cst_6 = arith.constant 0.000000e+00 : f32
    %12 = vector.broadcast %cst_6 : f32 to vector<8x128xf32>
    %13 = arith.subf %12, %11 : vector<8x128xf32>
    %14 = math.exp %13 : vector<8x128xf32>
    %cst_7 = arith.constant 0.531923056 : f32
    %15 = vector.broadcast %cst_7 : f32 to vector<8x128xf32>
    %16 = arith.mulf %15, %14 : vector<8x128xf32>
    %c0_8 = arith.constant 0 : index
    %c0_9 = arith.constant 0 : index
    %17 = vector.load %arg3[%c0_8, %c0_9] : memref<8x128xf32, #tpu.memory_space<vmem>>, vector<8x128xf32>
    tpu.vector_store %arg3[%c0_8, %c0_9], %16 {strides = array<i32>} : memref<8x128xf32, #tpu.memory_space<vmem>>, vector<8x128xf32>,
    return
  }
  func.func @transform_0(%arg0: i32) -> (i32, i32) {
    %c0_i32 = arith.constant 0 : i32
    %c0_i32_0 = arith.constant 0 : i32
    return %arg0, %c0_i32 : i32, i32
  }
  func.func @transform_1(%arg0: i32) -> (i32, i32) {
    %c0_i32 = arith.constant 0 : i32
    %c0_i32_0 = arith.constant 0 : i32
    return %arg0, %c0_i32 : i32, i32
  }
  func.func @transform_2(%arg0: i32) -> (i32, i32) {
    %c0_i32 = arith.constant 0 : i32
    %c0_i32_0 = arith.constant 0 : i32
    return %arg0, %c0_i32 : i32, i32
  }
}

</mosaic_0001>

<llo_original>
// kernel: tpu_custom_call.1
$region0: #{tpu_custom_call.1}
  #allocation0 [shape = 'u32[]', space=smem, size = 0x4, offset = 0x4, fixed_abs, tag = 'smem constant byte address 0x4 - core index']
  #allocation1 [shape = 'u32[72,128]{1,0:T(1,128)}', space=vmem, size = 0x9000, scoped, tag = 'internal scratch']
  %s0 = inlined_call_operand.hbm [shape: f32[16,128], index: 0, kind: input, shape index: {}]
  %s1 = inlined_call_operand.hbm [shape: f32[16,128], index: 1, kind: output, shape index: {0}]
  %s2 = inlined_call_operand.hbm [shape: f32[16,128], index: 2, kind: output, shape index: {1}]
  %3 = xla_tuple %s1, %s2
  %s4 = sld [smem:[#allocation0]]
  $region49: #{tpu_custom_call.1} parent=0
    _
  %s6 = ssub.s32 1, %s4
  %s7 = scalar_select 0, %s6, %s4
  $region1: #{tpu_custom_call.1} parent=0
    #allocation2 [shape = 'u8[8192]{0}', space=vmem, size = 0x2000, scoped, tag = 'input window, operand 0']
    #allocation3 [shape = 's32[2]{0}', space=sflag, size = 0x8, scoped, tag = 'scoped memory for tpu_custom_call.1']
    #allocation4 [shape = 's32[2]{0}', space=sflag, size = 0x8, scoped, tag = 'scoped memory for tpu_custom_call.1']
    #allocation5 [shape = 'u8[8192]{0}', space=vmem, size = 0x2000, scoped, tag = 'output window, operand 0']
    #allocation6 [shape = 'u8[8192]{0}', space=vmem, size = 0x2000, scoped, tag = 'output window, operand 1']
    #allocation7 [shape = 's32[2]{0}', space=sflag, size = 0x8, scoped, tag = 'scoped memory for tpu_custom_call.1']
    %8 = vsyncpa [#allocation3], 0
    %s9 = scalar_lea.sflag [#allocation3], 1
    %10 = vsyncpa %s9, 0
    %11 = vsyncpa [#allocation4], 0
    %s12 = scalar_lea.sflag [#allocation4], 1
    %13 = vsyncpa %s12, 0
    %14 = vsyncpa [#allocation7], 0
    %s15 = scalar_lea.sflag [#allocation7], 1
    %16 = vsyncpa %s15, 0
    loop: start=0, step=1, limit=4
    $region2: #{tpu_custom_call.1} parent=1 // loop_pre_header
      _
    $region3: #{tpu_custom_call.1} parent=1 // loop_header
      %s18 = sphi 0, %s22
      %p19 = scmp.ge.s32.totalorder %s18, 4
      %s28 = sphi 0, %s30
      %s31 = sphi 0, %s28
      %s32 = sphi 0, %s31
      %s48 = sphi 0, %s32
      %s54 = sphi 0, %s56
      %s57 = sphi 0, %s54
      %s58 = sphi 0, %s57
      %s74 = sphi 0, %s58
      %s80 = sphi 0, %s82
      %s83 = sphi 0, %s80
      %s84 = sphi 0, %s83
      %s100 = sphi 0, %s84
    $region4: #{tpu_custom_call.1} parent=1 // loop_header_branch
      %21 = sbr.rel (%p19) target = $region8
    $region5: #{tpu_custom_call.1} parent=1 // loop_body
      %s23 = ssub.s32 %s18, 1
      %s24 = ssub.s32 %s18, 2
      %s25 = sadd.s32 %s18, 1
      %s26 = ssub.s32 %s18, %s25
      %p27 = scmp.eq.s32.totalorder %s26, 0
      %s29 = sadd.s32 %s28, 1
      %s30 = scalar_select %p27, %s28, %s29
      %p33 = pneg %p27
      %p34 = scmp.eq.s32.totalorder %s18, 1
      %p35 = por %p33, %p34
      %p36 = scmp.ne.s32.totalorder %s28, %s31
      %p37 = scmp.eq.s32.totalorder %s18, 0
      %p38 = por %p36, %p37
      %p39 = scmp.ne.s32.totalorder %s28, %s31
      %p40 = scmp.eq.s32.totalorder %s23, 1
      %p41 = por %p39, %p40
      %p42 = scmp.ne.s32.totalorder %s31, %s32
      %p43 = scmp.eq.s32.totalorder %s23, 0
      %p44 = por %p42, %p43
      %p45 = scmp.ne.s32.totalorder %s31, %s32
      %p46 = scmp.eq.s32.totalorder %s24, 1
      %p47 = por %p45, %p46
      %p49 = scmp.ne.s32.totalorder %s32, %s48
      %p50 = scmp.eq.s32.totalorder %s24, 0
      %p51 = por %p49, %p50
      %s52 = ssub.s32 %s18, %s25
      %p53 = scmp.eq.s32.totalorder %s52, 0
      %s55 = sadd.s32 %s54, 1
      %s56 = scalar_select %p53, %s54, %s55
      %p59 = pneg %p53
      %p60 = scmp.eq.s32.totalorder %s18, 1
      %p61 = por %p59, %p60
      %p62 = scmp.ne.s32.totalorder %s54, %s57
      %p63 = scmp.eq.s32.totalorder %s18, 0
      %p64 = por %p62, %p63
      %p65 = scmp.ne.s32.totalorder %s54, %s57
      %p66 = scmp.eq.s32.totalorder %s23, 1
      %p67 = por %p65, %p66
      %p68 = scmp.ne.s32.totalorder %s57, %s58
      %p69 = scmp.eq.s32.totalorder %s23, 0
      %p70 = por %p68, %p69
      %p71 = scmp.ne.s32.totalorder %s57, %s58
      %p72 = scmp.eq.s32.totalorder %s24, 1
      %p73 = por %p71, %p72
      %p75 = scmp.ne.s32.totalorder %s58, %s74
      %p76 = scmp.eq.s32.totalorder %s24, 0
      %p77 = por %p75, %p76
      %s78 = ssub.s32 %s18, %s25
      %p79 = scmp.eq.s32.totalorder %s78, 0
      %s81 = sadd.s32 %s80, 1
      %s82 = scalar_select %p79, %s80, %s81
      %p85 = pneg %p79
      %p86 = scmp.eq.s32.totalorder %s18, 1
      %p87 = por %p85, %p86
      %p88 = scmp.ne.s32.totalorder %s80, %s83
      %p89 = scmp.eq.s32.totalorder %s18, 0
      %p90 = por %p88, %p89
      %p91 = scmp.ne.s32.totalorder %s80, %s83
      %p92 = scmp.eq.s32.totalorder %s23, 1
      %p93 = por %p91, %p92
      %p94 = scmp.ne.s32.totalorder %s83, %s84
      %p95 = scmp.eq.s32.totalorder %s23, 0
      %p96 = por %p94, %p95
      %p97 = scmp.ne.s32.totalorder %s83, %s84
      %p98 = scmp.eq.s32.totalorder %s24, 1
      %p99 = por %p97, %p98
      %p101 = scmp.ne.s32.totalorder %s84, %s100
      %p102 = scmp.eq.s32.totalorder %s24, 0
      %p103 = por %p101, %p102
      %p104 = scmp.le.s32.totalorder 1, %s18
      %p105 = scmp.lt.s32.totalorder %s18, 3
      %p106 = pnand %p104, %p105
      %p107 = pneg %p106
      // Predicated region
      $region9: #{tpu_custom_call.1} parent=5 // pred_check
        _
      $region10: #{tpu_custom_call.1} parent=5 // pred_check_branch
        %109 = sbr.rel (%p106) target = $region12
      $region11: #{tpu_custom_call.1} parent=5 // pred_region
        %s110 = ssub.s32 %s18, 1
      $region12: #{tpu_custom_call.1} parent=5 // pred_fallthru
        _
      %p111 = scmp.lt.s32.totalorder %s18, 2
      // Predicated region
      $region13: #{tpu_custom_call.1} parent=5 // pred_check
        %p112 = pneg %p111
      $region14: #{tpu_custom_call.1} parent=5 // pred_check_branch
        %114 = sbr.rel (%p112) target = $region16
      $region15: #{tpu_custom_call.1} parent=5 // pred_region
        // Predicated region
        $region17: #{tpu_custom_call.1} parent=15 // pred_check
          %p115 = pneg %p38
        $region18: #{tpu_custom_call.1} parent=15 // pred_check_branch
          %117 = sbr.rel (%p115) target = $region20
        $region19: #{tpu_custom_call.1} parent=15 // pred_region
          %s118 = sand.u32 %s28, 1
          %s119 = scalar_lea.sflag [#allocation3], %s118
          %s120 = sand.u32 %s28, 1
          %s121 = smul.addr %s120, 8
          %s122 = scalar_lea.vmem [#allocation2], %s121
          %124 = vsyncadd %s119, 0
          %s125 = smul.addr %s18, 8
          %s126 = scalar_lea.hbm %s0, %s125
          %s128 = sshll.u32 %s126, 4
          %s129 = int_to_ptr.hbm [resolvable:$true] %s128
          %s130 = sshll.u32 %s122, 4
          %s131 = int_to_ptr.vmem [resolvable:$true] %s130
          %133 = dma.hbm_to_vmem [thread:$0]  %s129, 128, %s131, %s119
        $region20: #{tpu_custom_call.1} parent=15 // pred_fallthru
          _
      $region16: #{tpu_custom_call.1} parent=5 // pred_fallthru
        _
      %p134 = scmp.le.s32.totalorder 1, %s18
      %p135 = scmp.lt.s32.totalorder %s18, 3
      %p136 = pnand %p134, %p135
      %p137 = pneg %p136
      // Predicated region
      $region21: #{tpu_custom_call.1} parent=5 // pred_check
        _
      $region22: #{tpu_custom_call.1} parent=5 // pred_check_branch
        %139 = sbr.rel (%p136) target = $region24
      $region23: #{tpu_custom_call.1} parent=5 // pred_region
        %s140 = ssub.s32 %s18, 1
        %s141 = sand.u32 %s31, 1
        %s142 = scalar_lea.sflag [#allocation3], %s141
        %s143 = sand.u32 %s31, 1
        %s144 = smul.addr %s143, 8
        %s145 = scalar_lea.vmem [#allocation2], %s144
        // Predicated region
        $region25: #{tpu_custom_call.1} parent=23 // pred_check
          %p146 = pneg %p44
        $region26: #{tpu_custom_call.1} parent=23 // pred_check_branch
          %148 = sbr.rel (%p146) target = $region28
        $region27: #{tpu_custom_call.1} parent=23 // pred_region
          %150 = dma.done %s142, 128
        $region28: #{tpu_custom_call.1} parent=23 // pred_fallthru
          _
        %s151 = sand.u32 %s31, 1
        %s152 = scalar_lea.sflag [#allocation3], %s151
        %s153 = sand.u32 %s31, 1
        %s154 = smul.addr %s153, 8
        %s155 = scalar_lea.vmem [#allocation2], %s154
        %p156 = pneg %p44
        %p157 = pneg %p41
        %p158 = pneg %p70
        %p159 = pneg %p67
        %s160 = sand.u32 %s57, 1
        %s161 = scalar_lea.sflag [#allocation4], %s160
        %s162 = sand.u32 %s57, 1
        %s163 = smul.addr %s162, 8
        %s164 = scalar_lea.vmem [#allocation5], %s163
        %p165 = pneg %p96
        %p166 = pneg %p93
        %s167 = sand.u32 %s83, 1
        %s168 = scalar_lea.sflag [#allocation7], %s167
        %s169 = sand.u32 %s83, 1
        %s170 = smul.addr %s169, 8
        %s171 = scalar_lea.vmem [#allocation6], %s170
        %v172 = vld [vmem:[%s145] sm:$0xff]
        %v173 = vsub.f32 %v172, 0.25
        %v174 = vmul.f32 %v173, 0.47140452
        %v175 = vmul.f32 %v174, %v174
        %v176 = vmin.f32 16.0, %v175
        %v177 = vmul.f32 %v176, 2.1237322e-06
        %v178 = vadd.f32 %v177, 0.00028619796
        %v179 = vmul.f32 %v176, %v178
        %v180 = vadd.f32 %v179, 0.0036580483
        %v181 = vmul.f32 %v176, %v180
        %v182 = vadd.f32 %v181, 0.05243302
        %v183 = vmul.f32 %v176, %v182
        %v184 = vadd.f32 %v183, 0.18741608
        %v185 = vmul.f32 %v176, %v184
        %v186 = vadd.f32 %v185, 1.1283791
        %v187 = vmul.f32 %v174, %v186
        %v188 = vmul.f32 %v176, 3.8918573e-05
        %v189 = vadd.f32 %v188, 0.001143296
        %v190 = vmul.f32 %v176, %v189
        %v191 = vadd.f32 %v190, 0.014752088
        %v192 = vmul.f32 %v176, %v191
        %v193 = vadd.f32 %v192, 0.112945676
        %v194 = vmul.f32 %v176, %v193
        %v195 = vadd.f32 %v194, 0.4994258
        %v196 = vmul.f32 %v176, %v195
        %v197 = vadd.f32 %v196, 1.0
        %v198 = vrcp.pop %v197
        %v199 = vmul.f32 %v197, %v198
        %v200 = vsub.f32 1.0, %v199
        %v201 = vmul.f32 %v198, %v200
        %v202 = vadd.f32 %v198, %v201
        %vm203 = vweird.f32 %v197
        %vm204 = vweird.f32 %v198
        %vm205 = vmor %vm203, %vm204
        %v206 = vsel %vm205, %v198, %v202
        %v207 = vand.u32 2147483647, %v197
        %vm208 = vcmp.eq.f32.partialorder %v207, 8.507059e+37
        %v209 = vand.u32 %v197, 2147483648
        %v210 = vor.u32 1.1754944e-38, %v209
        %v211 = vsel %vm208, %v210, %v206
        %v212 = vmul.f32 %v187, %v211
        %v213 = vmin.f32 %v212, 1.0
        %v214 = vmax.f32 %v213, -1.0
        %v215 = vadd.f32 %v214, 1.0
        %v216 = vmul.f32 %v215, 0.5
        %217 = vst [vmem:[%s164] sm:$0xff] %v216
        %v218 = vmul.f32 %v174, %v174
        %v219 = vsub.f32 0.0, %v218
        %v220 = vmul.f32 %v219, 1.442695
        %v221 = vpow.pop %v220
        %v222 = vmul.f32 %v221, 0.53192306
        %223 = vst [vmem:[%s171] sm:$0xff] %v222
        %s224 = sand.u32 %s57, 1
        %s225 = scalar_lea.sflag [#allocation4], %s224
        %s226 = sand.u32 %s57, 1
        %s227 = smul.addr %s226, 8
        %s228 = scalar_lea.vmem [#allocation5], %s227
        %s229 = sand.u32 %s83, 1
        %s230 = scalar_lea.sflag [#allocation7], %s229
        %s231 = sand.u32 %s83, 1
        %s232 = smul.addr %s231, 8
        %s233 = scalar_lea.vmem [#allocation6], %s232
        // Predicated region
        $region29: #{tpu_custom_call.1} parent=23 // pred_check
          %p234 = pneg %p67
        $region30: #{tpu_custom_call.1} parent=23 // pred_check_branch
          %236 = sbr.rel (%p234) target = $region32
        $region31: #{tpu_custom_call.1} parent=23 // pred_region
          %238 = vsyncadd %s225, 0
          %s239 = smul.addr %s23, 8
          %s240 = scalar_lea.hbm %s1, %s239
          %s242 = sshll.u32 %s228, 4
          %s243 = int_to_ptr.vmem [resolvable:$true] %s242
          %s244 = sshll.u32 %s240, 4
          %s245 = int_to_ptr.hbm [resolvable:$true] %s244
          %247 = dma.vmem_to_hbm [thread:$0]  %s243, 128, %s245, %s225
        $region32: #{tpu_custom_call.1} parent=23 // pred_fallthru
          _
        // Predicated region
        $region33: #{tpu_custom_call.1} parent=23 // pred_check
          %p248 = pneg %p93
        $region34: #{tpu_custom_call.1} parent=23 // pred_check_branch
          %250 = sbr.rel (%p248) target = $region36
        $region35: #{tpu_custom_call.1} parent=23 // pred_region
          %252 = vsyncadd %s230, 0
          %s253 = smul.addr %s23, 8
          %s254 = scalar_lea.hbm %s2, %s253
          %s256 = sshll.u32 %s233, 4
          %s257 = int_to_ptr.vmem [resolvable:$true] %s256
          %s258 = sshll.u32 %s254, 4
          %s259 = int_to_ptr.hbm [resolvable:$true] %s258
          %261 = dma.vmem_to_hbm [thread:$0]  %s257, 128, %s259, %s230
        $region36: #{tpu_custom_call.1} parent=23 // pred_fallthru
          _
      $region24: #{tpu_custom_call.1} parent=5 // pred_fallthru
        _
      %p262 = scmp.le.s32.totalorder 2, %s18
      // Predicated region
      $region37: #{tpu_custom_call.1} parent=5 // pred_check
        %p263 = pneg %p262
      $region38: #{tpu_custom_call.1} parent=5 // pred_check_branch
        %265 = sbr.rel (%p263) target = $region40
      $region39: #{tpu_custom_call.1} parent=5 // pred_region
        %s266 = ssub.s32 %s18, 2
        // Predicated region
        $region41: #{tpu_custom_call.1} parent=39 // pred_check
          %p267 = pneg %p73
        $region42: #{tpu_custom_call.1} parent=39 // pred_check_branch
          %269 = sbr.rel (%p267) target = $region44
        $region43: #{tpu_custom_call.1} parent=39 // pred_region
          %s270 = sand.u32 %s58, 1
          %s271 = scalar_lea.sflag [#allocation4], %s270
          %s272 = sand.u32 %s58, 1
          %s273 = smul.addr %s272, 8
          %s274 = scalar_lea.vmem [#allocation5], %s273
          %276 = dma.done %s271, 128
        $region44: #{tpu_custom_call.1} parent=39 // pred_fallthru
          _
        // Predicated region
        $region45: #{tpu_custom_call.1} parent=39 // pred_check
          %p277 = pneg %p99
        $region46: #{tpu_custom_call.1} parent=39 // pred_check_branch
          %279 = sbr.rel (%p277) target = $region48
        $region47: #{tpu_custom_call.1} parent=39 // pred_region
          %s280 = sand.u32 %s84, 1
          %s281 = scalar_lea.sflag [#allocation7], %s280
          %s282 = sand.u32 %s84, 1
          %s283 = smul.addr %s282, 8
          %s284 = scalar_lea.vmem [#allocation6], %s283
          %286 = dma.done %s281, 128
        $region48: #{tpu_custom_call.1} parent=39 // pred_fallthru
          _
      $region40: #{tpu_custom_call.1} parent=5 // pred_fallthru
        _
    $region6: #{tpu_custom_call.1} parent=1 // loop_footer
      %s22 = sadd.s32 1, %s18
    $region7: #{tpu_custom_call.1} parent=1 // loop_footer_branch
      %17 = sbr.rel target = $region3
    $region8: #{tpu_custom_call.1} parent=1 // loop_exit
      _
    %287 = vsyncpa [#allocation3], 1
    %s288 = scalar_lea.sflag [#allocation3], 1
    %289 = vsyncpa %s288, 1
    %290 = vsyncpa [#allocation4], 1
    %s291 = scalar_lea.sflag [#allocation4], 1
    %292 = vsyncpa %s291, 1
    %293 = vsyncpa [#allocation7], 1
    %s294 = scalar_lea.sflag [#allocation7], 1
    %295 = vsyncpa %s294, 1

</llo_original>
